<compile_context>
chip_gen: v6e
topology: v6e:2x2x1
jax: 0.10.0
libtpu: 0.0.40
codegen_flags: <defaults>
</compile_context>

<pallas_src>
import functools

import jax
import jax.numpy as jnp
from jax import lax
from jax.experimental import pallas as pl
from jax.experimental.pallas import tpu as pltpu

K2, P2 = 3, 1
K3, P3 = 5, 2
K4, P4 = 7, 3

_MAX_TILE_L = 1024  # output lane-tile; multiple of 128 whenever L is tiled.


def _fused_branch_kernel(x_ref, w_ref, o_ref, *, taps_by_phase, tile_l, win_l,
                         multi_tile):
    """One (batch, L-tile) step of the fused 3-branch conv.

    x_ref: (1, S, C_in, L_phase)  phase-decomposed zero-padded input (full row)
    w_ref: (K4, C_total, C_in)    fused per-tap weights of all three branches
    o_ref: (1, C_total, TILE_L)   NCW output tile (lane-dense)
    """
    if multi_tile:
        base = pl.multiple_of(pl.program_id(1) * tile_l, 128)
    else:
        base = 0  # single tile -> fully static slices

    acc = None
    for r, taps in taps_by_phase:                 # static unroll over phases
        # One lane-aligned window load per phase; taps are static shifts of it.
        win = x_ref[0, r, :, pl.ds(base, win_l)]  # (C_in, tile_l + wextra)
        for k, q in taps:                         # static unroll over K4 taps
            x_tap = win[:, q:q + tile_l]          # (C_in, TILE_L), static shift
            part = jnp.dot(w_ref[k], x_tap,       # (C_total, TILE_L) on MXU
                           preferred_element_type=jnp.float32)
            acc = part if acc is None else acc + part
    o_ref[0] = acc.astype(o_ref.dtype)


def _embed_weight(w, K, P):
    """(C, C_in, K) Conv1d weight -> (K4, C, C_in) at absolute tap offsets."""
    wt = jnp.transpose(w, (2, 0, 1))                    # (K, C, C_in)
    off = P4 - P                                        # tap offset in [0, K4)
    return jnp.pad(wt, ((off, K4 - K - off), (0, 0), (0, 0)))  # (K4, C, C_in)


def branch_conv1d(x, w2, w3, w4, stride):
    """BranchConv1D.forward: cat([b2(x), b3(x), b4(x)], dim=1), bias=False.

    x: (N, C_in, L) in PyTorch NCW layout.  w*: (C, C_in, K*) nn.Conv1d weights.
    """
    N, C_in, L = x.shape
    C = w2.shape[0]
    C_total = 3 * C
    S = int(stride)

    # All three branches share L_out because padding is "same"-style (2P=K-1).
    L_out = (L - 1) // S + 1

    # Output L-tiling: single full tile when it fits; otherwise prefer a
    # multiple-of-128 divisor of L_out (no padded output columns, no wrapper
    # slice); only pad when no divisor exists.
    if L_out <= _MAX_TILE_L:
        tile_l = L_out
    else:
        tile_l = 0
        cand = (_MAX_TILE_L // 128) * 128
        while cand >= 128:
            if L_out % cand == 0:
                tile_l = cand
                break
            cand -= 128
        if tile_l == 0:
            tile_l = _MAX_TILE_L
    num_tiles = -(-L_out // tile_l)
    L_out_pad = num_tiles * tile_l

    # Zero-pad once with the largest padding (P4) and phase-decompose so every
    # tap of every branch is a contiguous lane slice:
    #   x_ph[n, r, i, t] = x_pad[n, i, t*S + r]
    wextra = (K4 - 1) // S                      # max tap offset within a phase
    L_phase = L_out_pad + wextra
    L_total = S * L_phase
    x_pad = jnp.pad(x, ((0, 0), (0, 0), (P4, L_total - L - P4)))
    x_ph = jnp.transpose(x_pad.reshape(N, C_in, L_phase, S), (0, 3, 1, 2))

    # Fused weight in the ACTIVATION dtype: axis 0 = K4 absolute tap positions
    # (unused taps of the shorter kernels are zero), axis 1 = [b2|b3|b4] output
    # channels (torch.cat order), axis 2 = input channels.
    w_all = jnp.concatenate(
        [_embed_weight(w2, K2, P2),
         _embed_weight(w3, K3, P3),
         _embed_weight(w4, K4, P4)], axis=1).astype(x.dtype)

    # Absolute tap c -> (phase, in-phase offset), grouped by phase (static).
    taps_by_phase = tuple(
        (r, tuple((c, c // S) for c in range(K4) if c % S == r))
        for r in range(S) if any(c % S == r for c in range(K4)))

    win_l = tile_l + wextra

    # VMEM budget: double-buffered blocks + accumulator/window temps, above the
    # 16/32 MiB scoped defaults but capped at physical-size territory.
    itemsize = x.dtype.itemsize
    in_block = S * C_in * L_phase * itemsize
    w_block = K4 * C_total * C_in * itemsize
    out_block = C_total * tile_l * itemsize
    temps = C_total * tile_l * 4 + C_in * win_l * 4
    vmem_need = 2 * (in_block + w_block + out_block) + temps
    vmem_limit = int(min(max(2 * vmem_need, 32 * 1024 * 1024),
                         128 * 1024 * 1024))

    cost = pl.CostEstimate(
        flops=2 * N * L_out * C_total * C_in * K4,
        transcendentals=0,
        bytes_accessed=int(x.size * itemsize + w_all.size * itemsize
                           + N * C_total * L_out * itemsize))

    out = pl.pallas_call(
        functools.partial(_fused_branch_kernel, taps_by_phase=taps_by_phase,
                          tile_l=tile_l, win_l=win_l,
                          multi_tile=num_tiles > 1),
        out_shape=jax.ShapeDtypeStruct((N, C_total, L_out_pad), x.dtype),
        grid_spec=pltpu.PrefetchScalarGridSpec(
            num_scalar_prefetch=0,
            grid=(N, num_tiles),  # N leading (megacore splits batch), L inner
            in_specs=[
                pl.BlockSpec((1, S, C_in, L_phase), lambda n, l: (n, 0, 0, 0)),
                pl.BlockSpec((K4, C_total, C_in), lambda n, l: (0, 0, 0)),
            ],
            out_specs=pl.BlockSpec((1, C_total, tile_l), lambda n, l: (n, 0, l)),
        ),
        compiler_params=pltpu.CompilerParams(
            dimension_semantics=("parallel", "parallel"),
            vmem_limit_bytes=vmem_limit),
        cost_estimate=cost,
    )(x_ph, w_all)

    if L_out_pad != L_out:
        out = out[:, :, :L_out]
    return out


def _ref_conv1d(x, w, padding, stride):
    return lax.conv_general_dilated(
        x, w, window_strides=(stride,), padding=[(padding, padding)],
        dimension_numbers=('NCH', 'OIH', 'NCH'))


def _ref_branch_conv1d(x, w2, w3, w4, stride):
    return jnp.concatenate([
        _ref_conv1d(x, w2, P2, stride),
        _ref_conv1d(x, w3, P3, stride),
        _ref_conv1d(x, w4, P4, stride),
    ], axis=1)


if __name__ == "__main__":
    # Small shapes consistent with the module: N=2, in_channels=4, L=16,
    # out_channels=6 (C = 6 // 3 = 2 per branch).
    N, C_IN, L = 2, 4, 16
    OUT_CHANNELS = 6
    C = OUT_CHANNELS // 3

    key = jax.random.PRNGKey(0)
    kx, k2, k3, k4 = jax.random.split(key, 4)
    x = jax.random.normal(kx, (N, C_IN, L), dtype=jnp.float32)
    # nn.Conv1d weight shape: (out_channels, in_channels, kernel_size)
    w2 = 0.1 * jax.random.normal(k2, (C, C_IN, K2), dtype=jnp.float32)
    w3 = 0.1 * jax.random.normal(k3, (C, C_IN, K3), dtype=jnp.float32)
    w4 = 0.1 * jax.random.normal(k4, (C, C_IN, K4), dtype=jnp.float32)

    for stride in (1, 2):
        out = jax.block_until_ready(branch_conv1d(x, w2, w3, w4, stride))
        ref = _ref_branch_conv1d(x, w2, w3, w4, stride)
        assert out.shape == ref.shape, (stride, out.shape, ref.shape)
        err = float(jnp.max(jnp.abs(out - ref)))
        assert err < 1e-5, (stride, err)

    print("KERNEL_OK")
</pallas_src>

<mosaic_0001>
module attributes {stable_mosaic.version = 11 : i64} {
  func.func @_fused_branch_kernel(%arg0: i32, %arg1: i32, %arg2: memref<1x1x4x22xf32, #tpu.memory_space<vmem>>, %arg3: memref<7x6x4xf32, #tpu.memory_space<vmem>>, %arg4: memref<1x6x16xf32, #tpu.memory_space<vmem>>) attributes {dimension_semantics = [#tpu.dimension_semantics<parallel>, #tpu.dimension_semantics<parallel>], iteration_bounds = array<i64: 2, 1>, scalar_prefetch = 0 : i64, scratch_operands = 0 : i64, tpu.core_type = #tpu.core_type<tc>, window_params = [{transform_indices = @transform_0, window_bounds = array<i64: 1, 1, 4, 22>}, {pipeline_mode = #tpu.pipeline_mode<synchronous>, transform_indices = @transform_1, window_bounds = array<i64: 7, 6, 4>}, {transform_indices = @transform_2, window_bounds = array<i64: 1, 6, 16>}]} {
    %c0 = arith.constant 0 : index
    %c0_0 = arith.constant 0 : index
    %c0_1 = arith.constant 0 : index
    %c0_2 = arith.constant 0 : index
    %0 = vector.load %arg2[%c0, %c0_0, %c0_1, %c0_2] : memref<1x1x4x22xf32, #tpu.memory_space<vmem>>, vector<1x1x4x22xf32>
    %1 = vector.shape_cast %0 : vector<1x1x4x22xf32> to vector<4x22xf32>
    %2 = vector.extract_strided_slice %1 {offsets = [0, 0], sizes = [4, 16], strides = [1, 1]} : vector<4x22xf32> to vector<4x16xf32>
    %c0_3 = arith.constant 0 : index
    %c0_4 = arith.constant 0 : index
    %c0_5 = arith.constant 0 : index
    %3 = vector.load %arg3[%c0_3, %c0_4, %c0_5] : memref<7x6x4xf32, #tpu.memory_space<vmem>>, vector<1x6x4xf32>
    %4 = vector.shape_cast %3 : vector<1x6x4xf32> to vector<6x4xf32>
    %cst = arith.constant dense<0.000000e+00> : vector<6x16xf32>
    %5 = tpu.matmul %4, %2, %cst {dimension_numbers = #tpu.dot_dimension_numbers<[1], [0], [0], [1], [0, 0, 1, 1], [], []>} : vector<6x4xf32>, vector<4x16xf32>, vector<6x16xf32> -> vector<6x16xf32>
    %6 = vector.extract_strided_slice %1 {offsets = [0, 1], sizes = [4, 16], strides = [1, 1]} : vector<4x22xf32> to vector<4x16xf32>
    %c1 = arith.constant 1 : index
    %c0_6 = arith.constant 0 : index
    %c0_7 = arith.constant 0 : index
    %7 = vector.load %arg3[%c1, %c0_6, %c0_7] : memref<7x6x4xf32, #tpu.memory_space<vmem>>, vector<1x6x4xf32>
    %8 = vector.shape_cast %7 : vector<1x6x4xf32> to vector<6x4xf32>
    %cst_8 = arith.constant dense<0.000000e+00> : vector<6x16xf32>
    %9 = tpu.matmul %8, %6, %cst_8 {dimension_numbers = #tpu.dot_dimension_numbers<[1], [0], [0], [1], [0, 0, 1, 1], [], []>} : vector<6x4xf32>, vector<4x16xf32>, vector<6x16xf32> -> vector<6x16xf32>
    %10 = arith.addf %5, %9 : vector<6x16xf32>
    %11 = vector.extract_strided_slice %1 {offsets = [0, 2], sizes = [4, 16], strides = [1, 1]} : vector<4x22xf32> to vector<4x16xf32>
    %c2 = arith.constant 2 : index
    %c0_9 = arith.constant 0 : index
    %c0_10 = arith.constant 0 : index
    %12 = vector.load %arg3[%c2, %c0_9, %c0_10] : memref<7x6x4xf32, #tpu.memory_space<vmem>>, vector<1x6x4xf32>
    %13 = vector.shape_cast %12 : vector<1x6x4xf32> to vector<6x4xf32>
    %cst_11 = arith.constant dense<0.000000e+00> : vector<6x16xf32>
    %14 = tpu.matmul %13, %11, %cst_11 {dimension_numbers = #tpu.dot_dimension_numbers<[1], [0], [0], [1], [0, 0, 1, 1], [], []>} : vector<6x4xf32>, vector<4x16xf32>, vector<6x16xf32> -> vector<6x16xf32>
    %15 = arith.addf %10, %14 : vector<6x16xf32>
    %16 = vector.extract_strided_slice %1 {offsets = [0, 3], sizes = [4, 16], strides = [1, 1]} : vector<4x22xf32> to vector<4x16xf32>
    %c3 = arith.constant 3 : index
    %c0_12 = arith.constant 0 : index
    %c0_13 = arith.constant 0 : index
    %17 = vector.load %arg3[%c3, %c0_12, %c0_13] : memref<7x6x4xf32, #tpu.memory_space<vmem>>, vector<1x6x4xf32>
    %18 = vector.shape_cast %17 : vector<1x6x4xf32> to vector<6x4xf32>
    %cst_14 = arith.constant dense<0.000000e+00> : vector<6x16xf32>
    %19 = tpu.matmul %18, %16, %cst_14 {dimension_numbers = #tpu.dot_dimension_numbers<[1], [0], [0], [1], [0, 0, 1, 1], [], []>} : vector<6x4xf32>, vector<4x16xf32>, vector<6x16xf32> -> vector<6x16xf32>
    %20 = arith.addf %15, %19 : vector<6x16xf32>
    %21 = vector.extract_strided_slice %1 {offsets = [0, 4], sizes = [4, 16], strides = [1, 1]} : vector<4x22xf32> to vector<4x16xf32>
    %c4 = arith.constant 4 : index
    %c0_15 = arith.constant 0 : index
    %c0_16 = arith.constant 0 : index
    %22 = vector.load %arg3[%c4, %c0_15, %c0_16] : memref<7x6x4xf32, #tpu.memory_space<vmem>>, vector<1x6x4xf32>
    %23 = vector.shape_cast %22 : vector<1x6x4xf32> to vector<6x4xf32>
    %cst_17 = arith.constant dense<0.000000e+00> : vector<6x16xf32>
    %24 = tpu.matmul %23, %21, %cst_17 {dimension_numbers = #tpu.dot_dimension_numbers<[1], [0], [0], [1], [0, 0, 1, 1], [], []>} : vector<6x4xf32>, vector<4x16xf32>, vector<6x16xf32> -> vector<6x16xf32>
    %25 = arith.addf %20, %24 : vector<6x16xf32>
    %26 = vector.extract_strided_slice %1 {offsets = [0, 5], sizes = [4, 16], strides = [1, 1]} : vector<4x22xf32> to vector<4x16xf32>
    %c5 = arith.constant 5 : index
    %c0_18 = arith.constant 0 : index
    %c0_19 = arith.constant 0 : index
    %27 = vector.load %arg3[%c5, %c0_18, %c0_19] : memref<7x6x4xf32, #tpu.memory_space<vmem>>, vector<1x6x4xf32>
    %28 = vector.shape_cast %27 : vector<1x6x4xf32> to vector<6x4xf32>
    %cst_20 = arith.constant dense<0.000000e+00> : vector<6x16xf32>
    %29 = tpu.matmul %28, %26, %cst_20 {dimension_numbers = #tpu.dot_dimension_numbers<[1], [0], [0], [1], [0, 0, 1, 1], [], []>} : vector<6x4xf32>, vector<4x16xf32>, vector<6x16xf32> -> vector<6x16xf32>
    %30 = arith.addf %25, %29 : vector<6x16xf32>
    %31 = vector.extract_strided_slice %1 {offsets = [0, 6], sizes = [4, 16], strides = [1, 1]} : vector<4x22xf32> to vector<4x16xf32>
    %c6 = arith.constant 6 : index
    %c0_21 = arith.constant 0 : index
    %c0_22 = arith.constant 0 : index
    %32 = vector.load %arg3[%c6, %c0_21, %c0_22] : memref<7x6x4xf32, #tpu.memory_space<vmem>>, vector<1x6x4xf32>
    %33 = vector.shape_cast %32 : vector<1x6x4xf32> to vector<6x4xf32>
    %cst_23 = arith.constant dense<0.000000e+00> : vector<6x16xf32>
    %34 = tpu.matmul %33, %31, %cst_23 {dimension_numbers = #tpu.dot_dimension_numbers<[1], [0], [0], [1], [0, 0, 1, 1], [], []>} : vector<6x4xf32>, vector<4x16xf32>, vector<6x16xf32> -> vector<6x16xf32>
    %35 = arith.addf %30, %34 : vector<6x16xf32>
    %c0_24 = arith.constant 0 : index
    %c0_25 = arith.constant 0 : index
    %c0_26 = arith.constant 0 : index
    %36 = vector.load %arg4[%c0_24, %c0_25, %c0_26] : memref<1x6x16xf32, #tpu.memory_space<vmem>>, vector<1x6x16xf32>
    %37 = vector.shape_cast %36 : vector<1x6x16xf32> to vector<6x16xf32>
    %38 = vector.shape_cast %35 : vector<6x16xf32> to vector<1x6x16xf32>
    tpu.vector_store %arg4[%c0_24, %c0_25, %c0_26], %38 {strides = array<i32>} : memref<1x6x16xf32, #tpu.memory_space<vmem>>, vector<1x6x16xf32>,
    return
  }
  func.func @transform_0(%arg0: i32, %arg1: i32) -> (i32, i32, i32, i32) {
    %c0_i32 = arith.constant 0 : i32
    %c0_i32_0 = arith.constant 0 : i32
    %c0_i32_1 = arith.constant 0 : i32
    %c0_i32_2 = arith.constant 0 : i32
    return %arg0, %c0_i32, %c0_i32_0, %c0_i32_1 : i32, i32, i32, i32
  }
  func.func @transform_1(%arg0: i32, %arg1: i32) -> (i32, i32, i32) {
    %c0_i32 = arith.constant 0 : i32
    %c0_i32_0 = arith.constant 0 : i32
    %c0_i32_1 = arith.constant 0 : i32
    %c0_i32_2 = arith.constant 0 : i32
    return %c0_i32, %c0_i32_0, %c0_i32_1 : i32, i32, i32
  }
  func.func @transform_2(%arg0: i32, %arg1: i32) -> (i32, i32, i32) {
    %c0_i32 = arith.constant 0 : i32
    %c0_i32_0 = arith.constant 0 : i32
    return %arg0, %c0_i32, %arg1 : i32, i32, i32
  }
}

</mosaic_0001>

<llo_original>
// kernel: tpu_custom_call.1
$region0: #{tpu_custom_call.1}
  #allocation0 [shape = 'u32[]', space=smem, size = 0x4, offset = 0x4, fixed_abs, tag = 'smem constant byte address 0x4 - core index']
  #allocation1 [shape = 'u32[144,128]{1,0:T(1,128)}', space=vmem, size = 0x12000, scoped, tag = 'internal scratch']
  %s0 = inlined_call_operand.vmem [shape: f32[2,1,4,22], index: 0, kind: input, shape index: {}]
  %s1 = inlined_call_operand.vmem [shape: f32[7,6,4], index: 1, kind: input, shape index: {}]
  %s2 = inlined_call_operand.vmem [shape: f32[2,6,16], index: 2, kind: output, shape index: {}]
  %s3 = sld [smem:[#allocation0]]
  $region41: #{tpu_custom_call.1} parent=0
    _
  %s5 = ssub.s32 1, %s3
  %s6 = scalar_select 0, %s5, %s3
  loop: start=0, step=1, limit=4
  $region2: #{tpu_custom_call.1} parent=0 // loop_pre_header
    _
  $region3: #{tpu_custom_call.1} parent=0 // loop_header
    %s8 = sphi 0, %s12
    %p9 = scmp.ge.s32.totalorder %s8, 4
    %s15 = sphi 0, %s27
    %s16 = sphi 0, %s23
    %s17 = sphi 0, %s15
    %s18 = sphi 0, %s16
    %s19 = sphi 0, %s17
    %s20 = sphi 0, %s18
    %s30 = sphi 0, %s32
    %s33 = sphi 0, %s30
    %s34 = sphi 0, %s33
    %s50 = sphi 0, %s34
    %s54 = sphi 0, %s54
    %s56 = sphi 0, %s54
    %s57 = sphi 0, %s56
    %s71 = sphi 0, %s57
    %s79 = sphi 0, %s81
    %s82 = sphi 0, %s79
    %s83 = sphi 0, %s82
    %s99 = sphi 0, %s83
  $region4: #{tpu_custom_call.1} parent=0 // loop_header_branch
    %11 = sbr.rel (%p9) target = $region8
  $region5: #{tpu_custom_call.1} parent=0 // loop_body
    %s13 = ssub.s32 %s8, 1
    %s14 = ssub.s32 %s8, 2
    %s21 = sadd.s32 1, %s16
    %p22 = scmp.ge.s32.totalorder %s21, 1
    %s23 = scalar_select %p22, 0, %s21
    %s24 = sadd.s32 1, %s15
    %s25 = scalar_select %p22, %s24, %s15
    %p26 = scmp.ge.s32.totalorder %s25, 2
    %s27 = scalar_select %p26, 0, %s25
    %s28 = ssub.s32 %s15, %s27
    %p29 = scmp.eq.s32.totalorder %s28, 0
    %s31 = sadd.s32 %s30, 1
    %s32 = scalar_select %p29, %s30, %s31
    %p35 = pneg %p29
    %p36 = scmp.eq.s32.totalorder %s8, 1
    %p37 = por %p35, %p36
    %p38 = scmp.ne.s32.totalorder %s30, %s33
    %p39 = scmp.eq.s32.totalorder %s8, 0
    %p40 = por %p38, %p39
    %p41 = scmp.ne.s32.totalorder %s30, %s33
    %p42 = scmp.eq.s32.totalorder %s13, 1
    %p43 = por %p41, %p42
    %p44 = scmp.ne.s32.totalorder %s33, %s34
    %p45 = scmp.eq.s32.totalorder %s13, 0
    %p46 = por %p44, %p45
    %p47 = scmp.ne.s32.totalorder %s33, %s34
    %p48 = scmp.eq.s32.totalorder %s14, 1
    %p49 = por %p47, %p48
    %p51 = scmp.ne.s32.totalorder %s34, %s50
    %p52 = scmp.eq.s32.totalorder %s14, 0
    %p53 = por %p51, %p52
    %s55 = sadd.s32 %s54, 1
    %p58 = scmp.eq.s32.totalorder %s8, 1
    %p59 = scmp.ne.s32.totalorder %s54, %s56
    %p60 = scmp.eq.s32.totalorder %s8, 0
    %p61 = por %p59, %p60
    %p62 = scmp.ne.s32.totalorder %s54, %s56
    %p63 = scmp.eq.s32.totalorder %s13, 1
    %p64 = por %p62, %p63
    %p65 = scmp.ne.s32.totalorder %s56, %s57
    %p66 = scmp.eq.s32.totalorder %s13, 0
    %p67 = por %p65, %p66
    %p68 = scmp.ne.s32.totalorder %s56, %s57
    %p69 = scmp.eq.s32.totalorder %s14, 1
    %p70 = por %p68, %p69
    %p72 = scmp.ne.s32.totalorder %s57, %s71
    %p73 = scmp.eq.s32.totalorder %s14, 0
    %p74 = por %p72, %p73
    %s75 = ssub.s32 %s15, %s27
    %s76 = ssub.s32 %s16, %s23
    %s77 = sor.u32 %s75, %s76
    %p78 = scmp.eq.s32.totalorder %s77, 0
    %s80 = sadd.s32 %s79, 1
    %s81 = scalar_select %p78, %s79, %s80
    %p84 = pneg %p78
    %p85 = scmp.eq.s32.totalorder %s8, 1
    %p86 = por %p84, %p85
    %p87 = scmp.ne.s32.totalorder %s79, %s82
    %p88 = scmp.eq.s32.totalorder %s8, 0
    %p89 = por %p87, %p88
    %p90 = scmp.ne.s32.totalorder %s79, %s82
    %p91 = scmp.eq.s32.totalorder %s13, 1
    %p92 = por %p90, %p91
    %p93 = scmp.ne.s32.totalorder %s82, %s83
    %p94 = scmp.eq.s32.totalorder %s13, 0
    %p95 = por %p93, %p94
    %p96 = scmp.ne.s32.totalorder %s82, %s83
    %p97 = scmp.eq.s32.totalorder %s14, 1
    %p98 = por %p96, %p97
    %p100 = scmp.ne.s32.totalorder %s83, %s99
    %p101 = scmp.eq.s32.totalorder %s14, 0
    %p102 = por %p100, %p101
    %p103 = scmp.le.s32.totalorder 1, %s8
    %p104 = scmp.lt.s32.totalorder %s8, 3
    %p105 = pnand %p103, %p104
    %p106 = pneg %p105
    // Predicated region
    $region9: #{tpu_custom_call.1} parent=5 // pred_check
      _
    $region10: #{tpu_custom_call.1} parent=5 // pred_check_branch
      %108 = sbr.rel (%p105) target = $region12
    $region11: #{tpu_custom_call.1} parent=5 // pred_region
      %s109 = ssub.s32 %s8, 1
      // Predicated region
      $region13: #{tpu_custom_call.1} parent=11 // pred_check
        %p110 = pneg %p67
      $region14: #{tpu_custom_call.1} parent=11 // pred_check_branch
        %112 = sbr.rel (%p110) target = $region16
      $region15: #{tpu_custom_call.1} parent=11 // pred_region
        _
      $region16: #{tpu_custom_call.1} parent=11 // pred_fallthru
        _
    $region12: #{tpu_custom_call.1} parent=5 // pred_fallthru
      _
    %p113 = scmp.lt.s32.totalorder %s8, 2
    // Predicated region
    $region17: #{tpu_custom_call.1} parent=5 // pred_check
      %p114 = pneg %p113
    $region18: #{tpu_custom_call.1} parent=5 // pred_check_branch
      %116 = sbr.rel (%p114) target = $region20
    $region19: #{tpu_custom_call.1} parent=5 // pred_region
      // Predicated region
      $region21: #{tpu_custom_call.1} parent=19 // pred_check
        %p117 = pneg %p40
      $region22: #{tpu_custom_call.1} parent=19 // pred_check_branch
        %119 = sbr.rel (%p117) target = $region24
      $region23: #{tpu_custom_call.1} parent=19 // pred_region
        %p120 = scmp.lt.s32.totalorder %s15, 1
        %s121 = scalar_select %p120, %s15, 1
        %s122 = smul.addr %s121, 4
        %s123 = scalar_lea.vmem %s0, %s122
      $region24: #{tpu_custom_call.1} parent=19 // pred_fallthru
        _
    $region20: #{tpu_custom_call.1} parent=5 // pred_fallthru
      _
    %p124 = scmp.le.s32.totalorder 1, %s8
    %p125 = scmp.lt.s32.totalorder %s8, 3
    %p126 = pnand %p124, %p125
    %p127 = pneg %p126
    // Predicated region
    $region25: #{tpu_custom_call.1} parent=5 // pred_check
      _
    $region26: #{tpu_custom_call.1} parent=5 // pred_check_branch
      %129 = sbr.rel (%p126) target = $region28
    $region27: #{tpu_custom_call.1} parent=5 // pred_region
      %s130 = ssub.s32 %s8, 1
      %p131 = scmp.lt.s32.totalorder %s17, 1
      %s132 = scalar_select %p131, %s17, 1
      %s133 = smul.addr %s132, 4
      %s134 = scalar_lea.vmem %s0, %s133
      %p135 = pneg %p46
      %p136 = pneg %p43
      %p137 = pneg %p67
      %p138 = pneg %p64
      %p139 = pneg %p95
      %p140 = pneg %p92
      %p141 = scmp.lt.s32.totalorder %s17, 1
      %s142 = scalar_select %p141, %s17, 1
      %p143 = scmp.lt.s32.totalorder %s18, 0
      %s144 = scalar_select %p143, %s18, 0
      %s145 = sadd.s32 %s144, %s142
      %s146 = smul.addr %s145, 8
      %s147 = scalar_lea.vmem %s2, %s146
      %p148 = scmp.lt.s32.totalorder %s17, 1
      %s149 = scalar_select %p148, %s17, 1
      %s150 = smul.addr %s149, 4
      %s151 = scalar_lea.vmem %s0, %s150
      %p152 = scmp.lt.s32.totalorder %s17, 1
      %s153 = scalar_select %p152, %s17, 1
      %p154 = scmp.lt.s32.totalorder %s18, 0
      %s155 = scalar_select %p154, %s18, 0
      %s156 = sadd.s32 %s155, %s153
      %s157 = smul.addr %s156, 8
      %s158 = scalar_lea.vmem %s2, %s157
      %v159 = vld [vmem:[%s151] sm:$0xf]
      %v160 = vld [vmem:[%s1] sm:$0x3f]
      %s161 = scalar_lea.vmem %s1, 8
      %v162 = vld [vmem:[%s161] sm:$0x3f]
      %164 = vrot.lane.b32.xlu0 %v159, 127
      %v165 = vpop.permute.xlu0 %164
      %vm166 = vcmask 31744
      %v168 = vsel %vm166, %v162, 0
      %vm170 = vcmask 1043456
      %v171 = vsel %vm170, %v165, 0
      %173 = vmatprep.subr.mxu0 0.0
      %174 = vmatpush1.msra.mxu0 0.0
      %175 = vmatprep.subr.mxu0 0.0
      %176 = vmatpush1.msra.mxu0 0.0
      %177 = vmatprep.subr.mxu0 0.0
      %178 = vmatpush1.msra.mxu0 0.0
      %179 = vmatprep.subr.mxu0 0.0
      %180 = vmatpush1.msra.mxu0 0.0
      %181 = vmatprep.subr.mxu0 0.0
      %182 = vmatpush1.msra.mxu0 0.0
      %183 = vmatprep.subr.mxu0 0.0
      %184 = vmatpush1.msra.mxu0 0.0
      %185 = vmatprep.subr.mxu0 0.0
      %186 = vmatpush1.msra.mxu0 0.0
      %187 = vmatprep.subr.mxu0 0.0
      %188 = vmatpush1.msra.mxu0 0.0
      %189 = vmatprep.subr.mxu0 0.0
      %190 = vmatpush1.msra.mxu0 0.0
      %191 = vmatprep.subr.mxu0 0.0
      %192 = vmatpush1.msra.mxu0 0.0
      %193 = vmatprep.subr.mxu0 0.0
      %194 = vmatpush1.msra.mxu0 0.0
      %195 = vmatprep.subr.mxu0 0.0
      %196 = vmatpush1.msra.mxu0 0.0
      %197 = vmatprep.subr.mxu0 0.0
      %198 = vmatpush1.msra.mxu0 0.0
      %199 = vmatprep.subr.mxu0 0.0
      %200 = vmatpush1.msra.mxu0 0.0
      %201 = vmatprep.subr.mxu0 0.0
      %202 = vmatpush1.msra.mxu0 0.0
      %203 = vmatprep.subr.mxu0 0.0
      %204 = vmatpush1.msra.mxu0 %v171
      %205 = vmatprep.subr.mxu0 0.0
      %206 = vmatpush2.msra.mxu0 0.0
      %207 = vmatprep.subr.mxu0 0.0
      %208 = vmatpush2.msra.mxu0 0.0
      %209 = vmatprep.subr.mxu0 0.0
      %210 = vmatpush2.msra.mxu0 0.0
      %211 = vmatprep.subr.mxu0 0.0
      %212 = vmatpush2.msra.mxu0 0.0
      %213 = vmatprep.subr.mxu0 0.0
      %214 = vmatpush2.msra.mxu0 0.0
      %215 = vmatprep.subr.mxu0 0.0
      %216 = vmatpush2.msra.mxu0 0.0
      %217 = vmatprep.subr.mxu0 0.0
      %218 = vmatpush2.msra.mxu0 0.0
      %219 = vmatprep.subr.mxu0 0.0
      %220 = vmatpush2.msra.mxu0 0.0
      %221 = vmatprep.subr.mxu0 0.0
      %222 = vmatpush2.msra.mxu0 0.0
      %223 = vmatprep.subr.mxu0 0.0
      %224 = vmatpush2.msra.mxu0 0.0
      %225 = vmatprep.subr.mxu0 0.0
      %226 = vmatpush2.msra.mxu0 0.0
      %227 = vmatprep.subr.mxu0 0.0
      %228 = vmatpush2.msra.mxu0 0.0
      %229 = vmatprep.subr.mxu0 0.0
      %230 = vmatpush2.msra.mxu0 0.0
      %231 = vmatprep.subr.mxu0 0.0
      %232 = vmatpush2.msra.mxu0 0.0
      %233 = vmatprep.subr.mxu0 0.0
      %234 = vmatpush2.msra.mxu0 0.0
      %235 = vmatprep.subr.mxu0 0.0
      %236 = vmatpush2.msra.mxu0 0.0
      %237 = vmatprep.mubr.f32.mxu0 0.0
      %238 = vmatmul.mubr.f32.gmra.mxu0 %v168
      %v239 = vpop.f32.mrf.mxu0
      %v240 = vadd.f32 0.0, %v239
      %v241 = vpop.f32.mrf.mxu0
      %242 = vdwg.mxu0
      %v244 = vsel %vm166, %v160, 0
      %v246 = vsel %vm170, %v159, 0
      %248 = vmatprep.subr.mxu0 0.0
      %249 = vmatpush1.msra.mxu0 0.0
      %250 = vmatprep.subr.mxu0 0.0
      %251 = vmatpush1.msra.mxu0 0.0
      %252 = vmatprep.subr.mxu0 0.0
      %253 = vmatpush1.msra.mxu0 0.0
      %254 = vmatprep.subr.mxu0 0.0
      %255 = vmatpush1.msra.mxu0 0.0
      %256 = vmatprep.subr.mxu0 0.0
      %257 = vmatpush1.msra.mxu0 0.0
      %258 = vmatprep.subr.mxu0 0.0
      %259 = vmatpush1.msra.mxu0 0.0
      %260 = vmatprep.subr.mxu0 0.0
      %261 = vmatpush1.msra.mxu0 0.0
      %262 = vmatprep.subr.mxu0 0.0
      %263 = vmatpush1.msra.mxu0 0.0
      %264 = vmatprep.subr.mxu0 0.0
      %265 = vmatpush1.msra.mxu0 0.0
      %266 = vmatprep.subr.mxu0 0.0
      %267 = vmatpush1.msra.mxu0 0.0
      %268 = vmatprep.subr.mxu0 0.0
      %269 = vmatpush1.msra.mxu0 0.0
      %270 = vmatprep.subr.mxu0 0.0
      %271 = vmatpush1.msra.mxu0 0.0
      %272 = vmatprep.subr.mxu0 0.0
      %273 = vmatpush1.msra.mxu0 0.0
      %274 = vmatprep.subr.mxu0 0.0
      %275 = vmatpush1.msra.mxu0 0.0
      %276 = vmatprep.subr.mxu0 0.0
      %277 = vmatpush1.msra.mxu0 0.0
      %278 = vmatprep.subr.mxu0 0.0
      %279 = vmatpush1.msra.mxu0 %v246
      %280 = vmatprep.subr.mxu0 0.0
      %281 = vmatpush2.msra.mxu0 0.0
      %282 = vmatprep.subr.mxu0 0.0
      %283 = vmatpush2.msra.mxu0 0.0
      %284 = vmatprep.subr.mxu0 0.0
      %285 = vmatpush2.msra.mxu0 0.0
      %286 = vmatprep.subr.mxu0 0.0
      %287 = vmatpush2.msra.mxu0 0.0
      %288 = vmatprep.subr.mxu0 0.0
      %289 = vmatpush2.msra.mxu0 0.0
      %290 = vmatprep.subr.mxu0 0.0
      %291 = vmatpush2.msra.mxu0 0.0
      %292 = vmatprep.subr.mxu0 0.0
      %293 = vmatpush2.msra.mxu0 0.0
      %294 = vmatprep.subr.mxu0 0.0
      %295 = vmatpush2.msra.mxu0 0.0
      %296 = vmatprep.subr.mxu0 0.0
      %297 = vmatpush2.msra.mxu0 0.0
      %298 = vmatprep.subr.mxu0 0.0
      %299 = vmatpush2.msra.mxu0 0.0
      %300 = vmatprep.subr.mxu0 0.0
      %301 = vmatpush2.msra.mxu0 0.0
      %302 = vmatprep.subr.mxu0 0.0
      %303 = vmatpush2.msra.mxu0 0.0
      %304 = vmatprep.subr.mxu0 0.0
      %305 = vmatpush2.msra.mxu0 0.0
      %306 = vmatprep.subr.mxu0 0.0
      %307 = vmatpush2.msra.mxu0 0.0
      %308 = vmatprep.subr.mxu0 0.0
      %309 = vmatpush2.msra.mxu0 0.0
      %310 = vmatprep.subr.mxu0 0.0
      %311 = vmatpush2.msra.mxu0 0.0
      %312 = vmatprep.mubr.f32.mxu0 0.0
      %313 = vmatmul.mubr.f32.gmra.mxu0 %v244
      %v314 = vpop.f32.mrf.mxu0
      %v315 = vadd.f32 %v240, %v314
      %v316 = vpop.f32.mrf.mxu0
      %317 = vdwg.mxu0
      %s318 = scalar_lea.vmem %s1, 16
      %v319 = vld [vmem:[%s318] sm:$0x3f]
      %320 = vrot.lane.b32.xlu0 %v159, 126
      %v321 = vpop.permute.xlu0 %320
      %v323 = vsel %vm166, %v319, 0
      %v325 = vsel %vm170, %v321, 0
      %327 = vmatprep.subr.mxu0 0.0
      %328 = vmatpush1.msra.mxu0 0.0
      %329 = vmatprep.subr.mxu0 0.0
      %330 = vmatpush1.msra.mxu0 0.0
      %331 = vmatprep.subr.mxu0 0.0
      %332 = vmatpush1.msra.mxu0 0.0
      %333 = vmatprep.subr.mxu0 0.0
      %334 = vmatpush1.msra.mxu0 0.0
      %335 = vmatprep.subr.mxu0 0.0
      %336 = vmatpush1.msra.mxu0 0.0
      %337 = vmatprep.subr.mxu0 0.0
      %338 = vmatpush1.msra.mxu0 0.0
      %339 = vmatprep.subr.mxu0 0.0
      %340 = vmatpush1.msra.mxu0 0.0
      %341 = vmatprep.subr.mxu0 0.0
      %342 = vmatpush1.msra.mxu0 0.0
      %343 = vmatprep.subr.mxu0 0.0
      %344 = vmatpush1.msra.mxu0 0.0
      %345 = vmatprep.subr.mxu0 0.0
      %346 = vmatpush1.msra.mxu0 0.0
      %347 = vmatprep.subr.mxu0 0.0
      %348 = vmatpush1.msra.mxu0 0.0
      %349 = vmatprep.subr.mxu0 0.0
      %350 = vmatpush1.msra.mxu0 0.0
      %351 = vmatprep.subr.mxu0 0.0
      %352 = vmatpush1.msra.mxu0 0.0
      %353 = vmatprep.subr.mxu0 0.0
      %354 = vmatpush1.msra.mxu0 0.0
      %355 = vmatprep.subr.mxu0 0.0
      %356 = vmatpush1.msra.mxu0 0.0
      %357 = vmatprep.subr.mxu0 0.0
      %358 = vmatpush1.msra.mxu0 %v325
      %359 = vmatprep.subr.mxu0 0.0
      %360 = vmatpush2.msra.mxu0 0.0
      %361 = vmatprep.subr.mxu0 0.0
      %362 = vmatpush2.msra.mxu0 0.0
      %363 = vmatprep.subr.mxu0 0.0
      %364 = vmatpush2.msra.mxu0 0.0
      %365 = vmatprep.subr.mxu0 0.0
      %366 = vmatpush2.msra.mxu0 0.0
      %367 = vmatprep.subr.mxu0 0.0
      %368 = vmatpush2.msra.mxu0 0.0
      %369 = vmatprep.subr.mxu0 0.0
      %370 = vmatpush2.msra.mxu0 0.0
      %371 = vmatprep.subr.mxu0 0.0
      %372 = vmatpush2.msra.mxu0 0.0
      %373 = vmatprep.subr.mxu0 0.0
      %374 = vmatpush2.msra.mxu0 0.0
      %375 = vmatprep.subr.mxu0 0.0
      %376 = vmatpush2.msra.mxu0 0.0
      %377 = vmatprep.subr.mxu0 0.0
      %378 = vmatpush2.msra.mxu0 0.0
      %379 = vmatprep.subr.mxu0 0.0
      %380 = vmatpush2.msra.mxu0 0.0
      %381 = vmatprep.subr.mxu0 0.0
      %382 = vmatpush2.msra.mxu0 0.0
      %383 = vmatprep.subr.mxu0 0.0
      %384 = vmatpush2.msra.mxu0 0.0
      %385 = vmatprep.subr.mxu0 0.0
      %386 = vmatpush2.msra.mxu0 0.0
      %387 = vmatprep.subr.mxu0 0.0
      %388 = vmatpush2.msra.mxu0 0.0
      %389 = vmatprep.subr.mxu0 0.0
      %390 = vmatpush2.msra.mxu0 0.0
      %391 = vmatprep.mubr.f32.mxu0 0.0
      %392 = vmatmul.mubr.f32.gmra.mxu0 %v323
      %v393 = vpop.f32.mrf.mxu0
      %v394 = vadd.f32 0.0, %v393
      %v395 = vpop.f32.mrf.mxu0
      %396 = vdwg.mxu0
      %v397 = vadd.f32 %v315, %v394
      %s398 = scalar_lea.vmem %s1, 24
      %v399 = vld [vmem:[%s398] sm:$0x3f]
      %400 = vrot.lane.b32.xlu0 %v159, 125
      %v401 = vpop.permute.xlu0 %400
      %v403 = vsel %vm166, %v399, 0
      %v405 = vsel %vm170, %v401, 0
      %407 = vmatprep.subr.mxu0 0.0
      %408 = vmatpush1.msra.mxu0 0.0
      %409 = vmatprep.subr.mxu0 0.0
      %410 = vmatpush1.msra.mxu0 0.0
      %411 = vmatprep.subr.mxu0 0.0
      %412 = vmatpush1.msra.mxu0 0.0
      %413 = vmatprep.subr.mxu0 0.0
      %414 = vmatpush1.msra.mxu0 0.0
      %415 = vmatprep.subr.mxu0 0.0
      %416 = vmatpush1.msra.mxu0 0.0
      %417 = vmatprep.subr.mxu0 0.0
      %418 = vmatpush1.msra.mxu0 0.0
      %419 = vmatprep.subr.mxu0 0.0
      %420 = vmatpush1.msra.mxu0 0.0
      %421 = vmatprep.subr.mxu0 0.0
      %422 = vmatpush1.msra.mxu0 0.0
      %423 = vmatprep.subr.mxu0 0.0
      %424 = vmatpush1.msra.mxu0 0.0
      %425 = vmatprep.subr.mxu0 0.0
      %426 = vmatpush1.msra.mxu0 0.0
      %427 = vmatprep.subr.mxu0 0.0
      %428 = vmatpush1.msra.mxu0 0.0
      %429 = vmatprep.subr.mxu0 0.0
      %430 = vmatpush1.msra.mxu0 0.0
      %431 = vmatprep.subr.mxu0 0.0
      %432 = vmatpush1.msra.mxu0 0.0
      %433 = vmatprep.subr.mxu0 0.0
      %434 = vmatpush1.msra.mxu0 0.0
      %435 = vmatprep.subr.mxu0 0.0
      %436 = vmatpush1.msra.mxu0 0.0
      %437 = vmatprep.subr.mxu0 0.0
      %438 = vmatpush1.msra.mxu0 %v405
      %439 = vmatprep.subr.mxu0 0.0
      %440 = vmatpush2.msra.mxu0 0.0
      %441 = vmatprep.subr.mxu0 0.0
      %442 = vmatpush2.msra.mxu0 0.0
      %443 = vmatprep.subr.mxu0 0.0
      %444 = vmatpush2.msra.mxu0 0.0
      %445 = vmatprep.subr.mxu0 0.0
      %446 = vmatpush2.msra.mxu0 0.0
      %447 = vmatprep.subr.mxu0 0.0
      %448 = vmatpush2.msra.mxu0 0.0
      %449 = vmatprep.subr.mxu0 0.0
      %450 = vmatpush2.msra.mxu0 0.0
      %451 = vmatprep.subr.mxu0 0.0
      %452 = vmatpush2.msra.mxu0 0.0
      %453 = vmatprep.subr.mxu0 0.0
      %454 = vmatpush2.msra.mxu0 0.0
      %455 = vmatprep.subr.mxu0 0.0
      %456 = vmatpush2.msra.mxu0 0.0
      %457 = vmatprep.subr.mxu0 0.0
      %458 = vmatpush2.msra.mxu0 0.0
      %459 = vmatprep.subr.mxu0 0.0
      %460 = vmatpush2.msra.mxu0 0.0
      %461 = vmatprep.subr.mxu0 0.0
      %462 = vmatpush2.msra.mxu0 0.0
      %463 = vmatprep.subr.mxu0 0.0
      %464 = vmatpush2.msra.mxu0 0.0
      %465 = vmatprep.subr.mxu0 0.0
      %466 = vmatpush2.msra.mxu0 0.0
      %467 = vmatprep.subr.mxu0 0.0
      %468 = vmatpush2.msra.mxu0 0.0
      %469 = vmatprep.subr.mxu0 0.0
      %470 = vmatpush2.msra.mxu0 0.0
      %471 = vmatprep.mubr.f32.mxu0 0.0
      %472 = vmatmul.mubr.f32.gmra.mxu0 %v403
      %v473 = vpop.f32.mrf.mxu0
      %v474 = vadd.f32 0.0, %v473
      %v475 = vpop.f32.mrf.mxu0
      %476 = vdwg.mxu0
      %v477 = vadd.f32 %v397, %v474
      %s478 = scalar_lea.vmem %s1, 32
      %v479 = vld [vmem:[%s478] sm:$0x3f]
      %480 = vrot.lane.b32.xlu0 %v159, 124
      %v481 = vpop.permute.xlu0 %480
      %v483 = vsel %vm166, %v479, 0
      %v485 = vsel %vm170, %v481, 0
      %487 = vmatprep.subr.mxu0 0.0
      %488 = vmatpush1.msra.mxu0 0.0
      %489 = vmatprep.subr.mxu0 0.0
      %490 = vmatpush1.msra.mxu0 0.0
      %491 = vmatprep.subr.mxu0 0.0
      %492 = vmatpush1.msra.mxu0 0.0
      %493 = vmatprep.subr.mxu0 0.0
      %494 = vmatpush1.msra.mxu0 0.0
      %495 = vmatprep.subr.mxu0 0.0
      %496 = vmatpush1.msra.mxu0 0.0
      %497 = vmatprep.subr.mxu0 0.0
      %498 = vmatpush1.msra.mxu0 0.0
      %499 = vmatprep.subr.mxu0 0.0
      %500 = vmatpush1.msra.mxu0 0.0
      %501 = vmatprep.subr.mxu0 0.0
      %502 = vmatpush1.msra.mxu0 0.0
      %503 = vmatprep.subr.mxu0 0.0
      %504 = vmatpush1.msra.mxu0 0.0
      %505 = vmatprep.subr.mxu0 0.0
      %506 = vmatpush1.msra.mxu0 0.0
      %507 = vmatprep.subr.mxu0 0.0
      %508 = vmatpush1.msra.mxu0 0.0
      %509 = vmatprep.subr.mxu0 0.0
      %510 = vmatpush1.msra.mxu0 0.0
      %511 = vmatprep.subr.mxu0 0.0
      %512 = vmatpush1.msra.mxu0 0.0
      %513 = vmatprep.subr.mxu0 0.0
      %514 = vmatpush1.msra.mxu0 0.0
      %515 = vmatprep.subr.mxu0 0.0
      %516 = vmatpush1.msra.mxu0 0.0
      %517 = vmatprep.subr.mxu0 0.0
      %518 = vmatpush1.msra.mxu0 %v485
      %519 = vmatprep.subr.mxu0 0.0
      %520 = vmatpush2.msra.mxu0 0.0
      %521 = vmatprep.subr.mxu0 0.0
      %522 = vmatpush2.msra.mxu0 0.0
      %523 = vmatprep.subr.mxu0 0.0
      %524 = vmatpush2.msra.mxu0 0.0
      %525 = vmatprep.subr.mxu0 0.0
      %526 = vmatpush2.msra.mxu0 0.0
      %527 = vmatprep.subr.mxu0 0.0
      %528 = vmatpush2.msra.mxu0 0.0
      %529 = vmatprep.subr.mxu0 0.0
      %530 = vmatpush2.msra.mxu0 0.0
      %531 = vmatprep.subr.mxu0 0.0
      %532 = vmatpush2.msra.mxu0 0.0
      %533 = vmatprep.subr.mxu0 0.0
      %534 = vmatpush2.msra.mxu0 0.0
      %535 = vmatprep.subr.mxu0 0.0
      %536 = vmatpush2.msra.mxu0 0.0
      %537 = vmatprep.subr.mxu0 0.0
      %538 = vmatpush2.msra.mxu0 0.0
      %539 = vmatprep.subr.mxu0 0.0
      %540 = vmatpush2.msra.mxu0 0.0
      %541 = vmatprep.subr.mxu0 0.0
      %542 = vmatpush2.msra.mxu0 0.0
      %543 = vmatprep.subr.mxu0 0.0
      %544 = vmatpush2.msra.mxu0 0.0
      %545 = vmatprep.subr.mxu0 0.0
      %546 = vmatpush2.msra.mxu0 0.0
      %547 = vmatprep.subr.mxu0 0.0
      %548 = vmatpush2.msra.mxu0 0.0
      %549 = vmatprep.subr.mxu0 0.0
      %550 = vmatpush2.msra.mxu0 0.0
      %551 = vmatprep.mubr.f32.mxu0 0.0
      %552 = vmatmul.mubr.f32.gmra.mxu0 %v483
      %v553 = vpop.f32.mrf.mxu0
      %v554 = vadd.f32 0.0, %v553
      %v555 = vpop.f32.mrf.mxu0
      %556 = vdwg.mxu0
      %v557 = vadd.f32 %v477, %v554
      %s558 = scalar_lea.vmem %s1, 40
      %v559 = vld [vmem:[%s558] sm:$0x3f]
      %560 = vrot.lane.b32.xlu0 %v159, 123
      %v561 = vpop.permute.xlu0 %560
      %v563 = vsel %vm166, %v559, 0
      %v565 = vsel %vm170, %v561, 0
      %567 = vmatprep.subr.mxu0 0.0
      %568 = vmatpush1.msra.mxu0 0.0
      %569 = vmatprep.subr.mxu0 0.0
      %570 = vmatpush1.msra.mxu0 0.0
      %571 = vmatprep.subr.mxu0 0.0
      %572 = vmatpush1.msra.mxu0 0.0
      %573 = vmatprep.subr.mxu0 0.0
      %574 = vmatpush1.msra.mxu0 0.0
      %575 = vmatprep.subr.mxu0 0.0
      %576 = vmatpush1.msra.mxu0 0.0
      %577 = vmatprep.subr.mxu0 0.0
      %578 = vmatpush1.msra.mxu0 0.0
      %579 = vmatprep.subr.mxu0 0.0
      %580 = vmatpush1.msra.mxu0 0.0
      %581 = vmatprep.subr.mxu0 0.0
      %582 = vmatpush1.msra.mxu0 0.0
      %583 = vmatprep.subr.mxu0 0.0
      %584 = vmatpush1.msra.mxu0 0.0
      %585 = vmatprep.subr.mxu0 0.0
      %586 = vmatpush1.msra.mxu0 0.0
      %587 = vmatprep.subr.mxu0 0.0
      %588 = vmatpush1.msra.mxu0 0.0
      %589 = vmatprep.subr.mxu0 0.0
      %590 = vmatpush1.msra.mxu0 0.0
      %591 = vmatprep.subr.mxu0 0.0
      %592 = vmatpush1.msra.mxu0 0.0
      %593 = vmatprep.subr.mxu0 0.0
      %594 = vmatpush1.msra.mxu0 0.0
      %595 = vmatprep.subr.mxu0 0.0
      %596 = vmatpush1.msra.mxu0 0.0
      %597 = vmatprep.subr.mxu0 0.0
      %598 = vmatpush1.msra.mxu0 %v565
      %599 = vmatprep.subr.mxu0 0.0
      %600 = vmatpush2.msra.mxu0 0.0
      %601 = vmatprep.subr.mxu0 0.0
      %602 = vmatpush2.msra.mxu0 0.0
      %603 = vmatprep.subr.mxu0 0.0
      %604 = vmatpush2.msra.mxu0 0.0
      %605 = vmatprep.subr.mxu0 0.0
      %606 = vmatpush2.msra.mxu0 0.0
      %607 = vmatprep.subr.mxu0 0.0
      %608 = vmatpush2.msra.mxu0 0.0
      %609 = vmatprep.subr.mxu0 0.0
      %610 = vmatpush2.msra.mxu0 0.0
      %611 = vmatprep.subr.mxu0 0.0
      %612 = vmatpush2.msra.mxu0 0.0
      %613 = vmatprep.subr.mxu0 0.0
      %614 = vmatpush2.msra.mxu0 0.0
      %615 = vmatprep.subr.mxu0 0.0
      %616 = vmatpush2.msra.mxu0 0.0
      %617 = vmatprep.subr.mxu0 0.0
      %618 = vmatpush2.msra.mxu0 0.0
      %619 = vmatprep.subr.mxu0 0.0
      %620 = vmatpush2.msra.mxu0 0.0
      %621 = vmatprep.subr.mxu0 0.0
      %622 = vmatpush2.msra.mxu0 0.0
      %623 = vmatprep.subr.mxu0 0.0
      %624 = vmatpush2.msra.mxu0 0.0
      %625 = vmatprep.subr.mxu0 0.0
      %626 = vmatpush2.msra.mxu0 0.0
      %627 = vmatprep.subr.mxu0 0.0
      %628 = vmatpush2.msra.mxu0 0.0
      %629 = vmatprep.subr.mxu0 0.0
      %630 = vmatpush2.msra.mxu0 0.0
      %631 = vmatprep.mubr.f32.mxu0 0.0
      %632 = vmatmul.mubr.f32.gmra.mxu0 %v563
      %v633 = vpop.f32.mrf.mxu0
      %v634 = vadd.f32 0.0, %v633
      %v635 = vpop.f32.mrf.mxu0
      %636 = vdwg.mxu0
      %v637 = vadd.f32 %v557, %v634
      %s638 = scalar_lea.vmem %s1, 48
      %v639 = vld [vmem:[%s638] sm:$0x3f]
      %640 = vrot.lane.b32.xlu0 %v159, 122
      %v641 = vpop.permute.xlu0 %640
      %v643 = vsel %vm166, %v639, 0
      %v645 = vsel %vm170, %v641, 0
      %647 = vmatprep.subr.mxu0 0.0
      %648 = vmatpush1.msra.mxu0 0.0
      %649 = vmatprep.subr.mxu0 0.0
      %650 = vmatpush1.msra.mxu0 0.0
      %651 = vmatprep.subr.mxu0 0.0
      %652 = vmatpush1.msra.mxu0 0.0
      %653 = vmatprep.subr.mxu0 0.0
      %654 = vmatpush1.msra.mxu0 0.0
      %655 = vmatprep.subr.mxu0 0.0
      %656 = vmatpush1.msra.mxu0 0.0
      %657 = vmatprep.subr.mxu0 0.0
      %658 = vmatpush1.msra.mxu0 0.0
      %659 = vmatprep.subr.mxu0 0.0
      %660 = vmatpush1.msra.mxu0 0.0
      %661 = vmatprep.subr.mxu0 0.0
      %662 = vmatpush1.msra.mxu0 0.0
      %663 = vmatprep.subr.mxu0 0.0
      %664 = vmatpush1.msra.mxu0 0.0
      %665 = vmatprep.subr.mxu0 0.0
      %666 = vmatpush1.msra.mxu0 0.0
      %667 = vmatprep.subr.mxu0 0.0
      %668 = vmatpush1.msra.mxu0 0.0
      %669 = vmatprep.subr.mxu0 0.0
      %670 = vmatpush1.msra.mxu0 0.0
      %671 = vmatprep.subr.mxu0 0.0
      %672 = vmatpush1.msra.mxu0 0.0
      %673 = vmatprep.subr.mxu0 0.0
      %674 = vmatpush1.msra.mxu0 0.0
      %675 = vmatprep.subr.mxu0 0.0
      %676 = vmatpush1.msra.mxu0 0.0
      %677 = vmatprep.subr.mxu0 0.0
      %678 = vmatpush1.msra.mxu0 %v645
      %679 = vmatprep.subr.mxu0 0.0
      %680 = vmatpush2.msra.mxu0 0.0
      %681 = vmatprep.subr.mxu0 0.0
      %682 = vmatpush2.msra.mxu0 0.0
      %683 = vmatprep.subr.mxu0 0.0
      %684 = vmatpush2.msra.mxu0 0.0
      %685 = vmatprep.subr.mxu0 0.0
      %686 = vmatpush2.msra.mxu0 0.0
      %687 = vmatprep.subr.mxu0 0.0
      %688 = vmatpush2.msra.mxu0 0.0
      %689 = vmatprep.subr.mxu0 0.0
      %690 = vmatpush2.msra.mxu0 0.0
      %691 = vmatprep.subr.mxu0 0.0
      %692 = vmatpush2.msra.mxu0 0.0
      %693 = vmatprep.subr.mxu0 0.0
      %694 = vmatpush2.msra.mxu0 0.0
      %695 = vmatprep.subr.mxu0 0.0
      %696 = vmatpush2.msra.mxu0 0.0
      %697 = vmatprep.subr.mxu0 0.0
      %698 = vmatpush2.msra.mxu0 0.0
      %699 = vmatprep.subr.mxu0 0.0
      %700 = vmatpush2.msra.mxu0 0.0
      %701 = vmatprep.subr.mxu0 0.0
      %702 = vmatpush2.msra.mxu0 0.0
      %703 = vmatprep.subr.mxu0 0.0
      %704 = vmatpush2.msra.mxu0 0.0
      %705 = vmatprep.subr.mxu0 0.0
      %706 = vmatpush2.msra.mxu0 0.0
      %707 = vmatprep.subr.mxu0 0.0
      %708 = vmatpush2.msra.mxu0 0.0
      %709 = vmatprep.subr.mxu0 0.0
      %710 = vmatpush2.msra.mxu0 0.0
      %711 = vmatprep.mubr.f32.mxu0 0.0
      %712 = vmatmul.mubr.f32.gmra.mxu0 %v643
      %v713 = vpop.f32.mrf.mxu0
      %v714 = vadd.f32 0.0, %v713
      %v715 = vpop.f32.mrf.mxu0
      %716 = vdwg.mxu0
      %v717 = vadd.f32 %v637, %v714
      %vm718 = vcmask 128000
      %719 = vst.msk [vmem:[%s158] sm:$0x3f] %vm718, %v717
      %p720 = scmp.lt.s32.totalorder %s17, 1
      %s721 = scalar_select %p720, %s17, 1
      %p722 = scmp.lt.s32.totalorder %s18, 0
      %s723 = scalar_select %p722, %s18, 0
      %s724 = sadd.s32 %s723, %s721
      %s725 = smul.addr %s724, 8
      %s726 = scalar_lea.vmem %s2, %s725
      // Predicated region
      $region29: #{tpu_custom_call.1} parent=27 // pred_check
        %p727 = pneg %p92
      $region30: #{tpu_custom_call.1} parent=27 // pred_check_branch
        %729 = sbr.rel (%p727) target = $region32
      $region31: #{tpu_custom_call.1} parent=27 // pred_region
        _
      $region32: #{tpu_custom_call.1} parent=27 // pred_fallthru
        _
    $region28: #{tpu_custom_call.1} parent=5 // pred_fallthru
      _
    %p730 = scmp.le.s32.totalorder 2, %s8
    // Predicated region
    $region33: #{tpu_custom_call.1} parent=5 // pred_check
      %p731 = pneg %p730
    $region34: #{tpu_custom_call.1} parent=5 // pred_check_branch
      %733 = sbr.rel (%p731) target = $region36
    $region35: #{tpu_custom_call.1} parent=5 // pred_region
      %s734 = ssub.s32 %s8, 2
      // Predicated region
      $region37: #{tpu_custom_call.1} parent=35 // pred_check
        %p735 = pneg %p98
      $region38: #{tpu_custom_call.1} parent=35 // pred_check_branch
        %737 = sbr.rel (%p735) target = $region40
      $region39: #{tpu_custom_call.1} parent=35 // pred_region
        %p738 = scmp.lt.s32.totalorder %s19, 1
        %s739 = scalar_select %p738, %s19, 1
        %p740 = scmp.lt.s32.totalorder %s20, 0
        %s741 = scalar_select %p740, %s20, 0
        %s742 = sadd.s32 %s741, %s739
        %s743 = smul.addr %s742, 8
        %s744 = scalar_lea.vmem %s2, %s743
      $region40: #{tpu_custom_call.1} parent=35 // pred_fallthru
        _
    $region36: #{tpu_custom_call.1} parent=5 // pred_fallthru
      _
  $region6: #{tpu_custom_call.1} parent=0 // loop_footer
    %s12 = sadd.s32 1, %s8
  $region7: #{tpu_custom_call.1} parent=0 // loop_footer_branch
    %7 = sbr.rel target = $region3
  $region8: #{tpu_custom_call.1} parent=0 // loop_exit
    _

</llo_original>
